<compile_context>
chip_gen: v5e
topology: v5e:2x2
jax: 0.10.0
libtpu: 0.0.40
codegen_flags: <defaults>
</compile_context>

<pallas_src>
import math

import jax
import jax.numpy as jnp
from jax.experimental import pallas as pl
from jax.experimental.pallas import tpu as pltpu

N_TRACK = 10
N_WAYPOINTS = 3
D_MODEL = 64
OUT_ROWS = 2 * N_WAYPOINTS   # row 2*q + o = coordinate o of waypoint q


def _planner_kernel(p_ref, left_ref, right_ref, out_ref):
    """One grid step processes b_tile batch elements (batch on the lane axis).

    p_ref    : SMEM (12,)  folded parameters
               [0:6]  A[q, c] (pre-scaled query weights, q-major)
               [6:10] WV[c, o] (row-major 2x2 value/head fold)
               [10:12] OB[o]  (folded output bias)
    left_ref : VMEM (2, N_TRACK, b_tile) bf16   [0] = x coords, [1] = y coords
    right_ref: VMEM (2, N_TRACK, b_tile) bf16
    out_ref  : VMEM (OUT_ROWS, b_tile) f32
    """
    # Upcast once on load; portable to v5e (no bf16 VPU) as well as v6e/v7x.
    xl = left_ref[0].astype(jnp.float32)       # (N_TRACK, B)
    yl = left_ref[1].astype(jnp.float32)
    xr = right_ref[0].astype(jnp.float32)
    yr = right_ref[1].astype(jnp.float32)

    wv00, wv01, wv10, wv11 = p_ref[6], p_ref[7], p_ref[8], p_ref[9]
    ob0, ob1 = p_ref[10], p_ref[11]

    rows = []
    for q in range(N_WAYPOINTS):               # n_waypoints = 3, unrolled
        ax, ay = p_ref[2 * q], p_ref[2 * q + 1]
        # Folded, pre-scaled attention logits.  The per-query bias C[q] is
        # constant over the softmax axis and cancels exactly -> dropped.
        sl = ax * xl + ay * yl                 # (N_TRACK, B)
        sr = ax * xr + ay * yr
        # Keep max-subtraction: input coordinate range is unbounded.
        m = jnp.maximum(jnp.max(sl, axis=0, keepdims=True),
                        jnp.max(sr, axis=0, keepdims=True))        # (1, B)
        el = jnp.exp(sl - m)
        er = jnp.exp(sr - m)
        denom = (jnp.sum(el, axis=0, keepdims=True)
                 + jnp.sum(er, axis=0, keepdims=True))             # (1, B)
        inv = pl.reciprocal(denom, approx=False)                   # exact
        # Reduce first, then apply the tiny 2x2 value/head fold to the reduced
        # (1, B) rows (exact reassociation of softmax(P) @ V @ w_out).
        sx = (jnp.sum(el * xl, axis=0, keepdims=True)
              + jnp.sum(er * xr, axis=0, keepdims=True))           # (1, B)
        sy = (jnp.sum(el * yl, axis=0, keepdims=True)
              + jnp.sum(er * yr, axis=0, keepdims=True))
        rows.append((wv00 * sx + wv10 * sy) * inv + ob0)           # coord 0
        rows.append((wv01 * sx + wv11 * sy) * inv + ob1)           # coord 1

    # Single lane-dense store of the whole (OUT_ROWS, b_tile) block.
    # (Per-row direct stores are the alternative; keep the proven single-store
    # form -- the difference is a handful of sublane-pack ops per tile.)
    out_ref[...] = jnp.concatenate(rows, axis=0)


def transformer_planner_forward(track_left, track_right, params, *, b_tile=8192):
    """track_left/track_right: (b, n_track, 2) -> (b, n_waypoints, 2) float32.

    b_tile: batch elements per grid step.  4096..16384 is the reasonable range
    for large batches (sweep it); the effective tile is clamped so tiny batches
    are only padded to a multiple of 128 lanes.  On v7x keep b >= 2*b_tile if
    you want both TensorCores busy.  Wrap this function in jax.jit so the
    bf16 cast / pad / transpose fuse into one pass over the inputs.
    """
    b = track_left.shape[0]
    w_in, b_in, q_embed, w_out, b_out = [p.astype(jnp.float32) for p in params]

    # ---- weight-time folds (parameter-only, exact reassociation) ----
    scale = 1.0 / math.sqrt(D_MODEL)
    A = (q_embed * scale) @ w_in.T              # (n_waypoints, 2)
    WV = w_in @ w_out                           # (2, 2)
    OB = b_in[0] @ w_out + b_out[0]             # (2,)
    packed = jnp.concatenate(
        [A.reshape(-1), WV.reshape(-1), OB]).astype(jnp.float32)   # (12,)

    # ---- lane-dense bf16 input layout: (2, n_track, b_pad), batch on lanes ----
    b_tile_eff = max(128, min(b_tile, pl.cdiv(b, 128) * 128))
    n_blocks = pl.cdiv(b, b_tile_eff)
    b_pad = n_blocks * b_tile_eff

    def to_lane_dense(t):
        t = t.astype(jnp.bfloat16)
        if b_pad != b:
            t = jnp.pad(t, ((0, b_pad - b), (0, 0), (0, 0)))
        return jnp.transpose(t, (2, 1, 0))      # (2, N_TRACK, b_pad)

    left_t = to_lane_dense(track_left)
    right_t = to_lane_dense(track_right)

    out_t = pl.pallas_call(
        _planner_kernel,
        out_shape=jax.ShapeDtypeStruct((OUT_ROWS, b_pad), jnp.float32),
        grid_spec=pl.GridSpec(
            grid=(n_blocks,),
            in_specs=[
                pl.BlockSpec(memory_space=pltpu.MemorySpace.SMEM),   # folded params
                pl.BlockSpec((2, N_TRACK, b_tile_eff), lambda i: (0, 0, i)),
                pl.BlockSpec((2, N_TRACK, b_tile_eff), lambda i: (0, 0, i)),
            ],
            out_specs=pl.BlockSpec((OUT_ROWS, b_tile_eff), lambda i: (0, i)),
        ),
        compiler_params=pltpu.CompilerParams(
            dimension_semantics=("parallel",)),
    )(packed, left_t, right_t)

    # (OUT_ROWS, b_pad) lane-dense slab -> (b, n_waypoints, 2)
    return out_t.T[:b].reshape(b, N_WAYPOINTS, 2)


def init_params(key):
    k1, k2, k3, k4, k5 = jax.random.split(key, 5)
    w_in = jax.random.normal(k1, (2, D_MODEL), jnp.float32) * 0.1
    b_in = jax.random.normal(k2, (1, D_MODEL), jnp.float32) * 0.01
    q_embed = jax.random.normal(k3, (N_WAYPOINTS, D_MODEL), jnp.float32)  # nn.Embedding ~N(0,1)
    w_out = jax.random.normal(k4, (D_MODEL, 2), jnp.float32) * 0.1
    b_out = jax.random.normal(k5, (1, 2), jnp.float32) * 0.01
    return (w_in, b_in, q_embed, w_out, b_out)


def _reference_forward(track_left, track_right, params):
    """Unfolded pure-JAX f32 reference: projection -> cross-attention -> head."""
    w_in, b_in, q_embed, w_out, b_out = [p.astype(jnp.float32) for p in params]
    mem = jnp.concatenate([track_left, track_right], axis=1)        # (b, 20, 2)
    mem_p = mem @ w_in + b_in                                       # (b, 20, d)
    scores = jnp.einsum('qd,bmd->bqm', q_embed, mem_p) / math.sqrt(D_MODEL)
    probs = jax.nn.softmax(scores, axis=-1)
    attn = jnp.einsum('bqm,bmd->bqd', probs, mem_p)                 # (b, n_wp, d)
    return attn @ w_out + b_out                                     # (b, n_wp, 2)


if __name__ == "__main__":
    key = jax.random.PRNGKey(0)
    k_in, k_param = jax.random.split(key)
    kl, kr = jax.random.split(k_in)

    b = 2
    track_left = jax.random.normal(kl, (b, N_TRACK, 2), jnp.float32)
    track_right = jax.random.normal(kr, (b, N_TRACK, 2), jnp.float32)
    params = init_params(k_param)

    planner = jax.jit(transformer_planner_forward)   # fuses cast/pad/transpose
    out = planner(track_left, track_right, params)
    jax.block_until_ready(out)

    assert out.shape == (b, N_WAYPOINTS, 2), out.shape
    assert out.dtype == jnp.float32, out.dtype

    # Correctness vs. the unfolded f32 reference.  Tolerance covers the bf16
    # quantization of the input slab (the in-kernel math is exact f32).
    ref = _reference_forward(track_left, track_right, params)
    assert jnp.allclose(out, ref, rtol=2e-2, atol=2e-2), float(jnp.max(jnp.abs(out - ref)))

    print("KERNEL_OK")
</pallas_src>

<mosaic_0001>
module attributes {stable_mosaic.version = 11 : i64} {
  func.func @_planner_kernel(%arg0: i32, %arg1: memref<12xf32, #tpu.memory_space<smem>>, %arg2: memref<2x10x128xbf16, #tpu.memory_space<vmem>>, %arg3: memref<2x10x128xbf16, #tpu.memory_space<vmem>>, %arg4: memref<6x128xf32, #tpu.memory_space<vmem>>) attributes {dimension_semantics = [#tpu.dimension_semantics<parallel>], iteration_bounds = array<i64: 1>, scalar_prefetch = 0 : i64, scratch_operands = 0 : i64, tpu.core_type = #tpu.core_type<tc>, window_params = [{transform_indices = @transform_0, window_bounds = array<i64: 12>}, {transform_indices = @transform_1, window_bounds = array<i64: 2, 10, 128>}, {transform_indices = @transform_2, window_bounds = array<i64: 2, 10, 128>}, {transform_indices = @transform_3, window_bounds = array<i64: 6, 128>}]} {
    %c0 = arith.constant 0 : index
    %c0_0 = arith.constant 0 : index
    %c0_1 = arith.constant 0 : index
    %0 = vector.load %arg2[%c0, %c0_0, %c0_1] : memref<2x10x128xbf16, #tpu.memory_space<vmem>>, vector<1x10x128xbf16>
    %1 = vector.shape_cast %0 : vector<1x10x128xbf16> to vector<10x128xbf16>
    %2 = arith.extf %1 : vector<10x128xbf16> to vector<10x128xf32>
    %c1 = arith.constant 1 : index
    %c0_2 = arith.constant 0 : index
    %c0_3 = arith.constant 0 : index
    %3 = vector.load %arg2[%c1, %c0_2, %c0_3] : memref<2x10x128xbf16, #tpu.memory_space<vmem>>, vector<1x10x128xbf16>
    %4 = vector.shape_cast %3 : vector<1x10x128xbf16> to vector<10x128xbf16>
    %5 = arith.extf %4 : vector<10x128xbf16> to vector<10x128xf32>
    %c0_4 = arith.constant 0 : index
    %c0_5 = arith.constant 0 : index
    %c0_6 = arith.constant 0 : index
    %6 = vector.load %arg3[%c0_4, %c0_5, %c0_6] : memref<2x10x128xbf16, #tpu.memory_space<vmem>>, vector<1x10x128xbf16>
    %7 = vector.shape_cast %6 : vector<1x10x128xbf16> to vector<10x128xbf16>
    %8 = arith.extf %7 : vector<10x128xbf16> to vector<10x128xf32>
    %c1_7 = arith.constant 1 : index
    %c0_8 = arith.constant 0 : index
    %c0_9 = arith.constant 0 : index
    %9 = vector.load %arg3[%c1_7, %c0_8, %c0_9] : memref<2x10x128xbf16, #tpu.memory_space<vmem>>, vector<1x10x128xbf16>
    %10 = vector.shape_cast %9 : vector<1x10x128xbf16> to vector<10x128xbf16>
    %11 = arith.extf %10 : vector<10x128xbf16> to vector<10x128xf32>
    %c6 = arith.constant 6 : index
    %12 = memref.load %arg1[%c6] : memref<12xf32, #tpu.memory_space<smem>>
    %c7 = arith.constant 7 : index
    %13 = memref.load %arg1[%c7] : memref<12xf32, #tpu.memory_space<smem>>
    %c8 = arith.constant 8 : index
    %14 = memref.load %arg1[%c8] : memref<12xf32, #tpu.memory_space<smem>>
    %c9 = arith.constant 9 : index
    %15 = memref.load %arg1[%c9] : memref<12xf32, #tpu.memory_space<smem>>
    %c10 = arith.constant 10 : index
    %16 = memref.load %arg1[%c10] : memref<12xf32, #tpu.memory_space<smem>>
    %c11 = arith.constant 11 : index
    %17 = memref.load %arg1[%c11] : memref<12xf32, #tpu.memory_space<smem>>
    %c0_10 = arith.constant 0 : index
    %18 = memref.load %arg1[%c0_10] : memref<12xf32, #tpu.memory_space<smem>>
    %c1_11 = arith.constant 1 : index
    %19 = memref.load %arg1[%c1_11] : memref<12xf32, #tpu.memory_space<smem>>
    %20 = vector.broadcast %18 : f32 to vector<10x128xf32>
    %21 = arith.mulf %20, %2 : vector<10x128xf32>
    %22 = vector.broadcast %19 : f32 to vector<10x128xf32>
    %23 = arith.mulf %22, %5 : vector<10x128xf32>
    %24 = arith.addf %21, %23 : vector<10x128xf32>
    %25 = vector.broadcast %18 : f32 to vector<10x128xf32>
    %26 = arith.mulf %25, %8 : vector<10x128xf32>
    %27 = vector.broadcast %19 : f32 to vector<10x128xf32>
    %28 = arith.mulf %27, %11 : vector<10x128xf32>
    %29 = arith.addf %26, %28 : vector<10x128xf32>
    %cst = arith.constant dense<0xFF800000> : vector<128xf32>
    %30 = vector.multi_reduction <maximumf>, %24, %cst [0] : vector<10x128xf32> to vector<128xf32>
    %31 = vector.shape_cast %30 : vector<128xf32> to vector<1x128xf32>
    %cst_12 = arith.constant dense<0xFF800000> : vector<128xf32>
    %32 = vector.multi_reduction <maximumf>, %29, %cst_12 [0] : vector<10x128xf32> to vector<128xf32>
    %33 = vector.shape_cast %32 : vector<128xf32> to vector<1x128xf32>
    %34 = arith.maximumf %31, %33 : vector<1x128xf32>
    %35 = vector.broadcast %34 : vector<1x128xf32> to vector<10x128xf32>
    %36 = arith.subf %24, %35 : vector<10x128xf32>
    %37 = math.exp %36 : vector<10x128xf32>
    %38 = vector.broadcast %34 : vector<1x128xf32> to vector<10x128xf32>
    %39 = arith.subf %29, %38 : vector<10x128xf32>
    %40 = math.exp %39 : vector<10x128xf32>
    %cst_13 = arith.constant dense<0.000000e+00> : vector<128xf32>
    %41 = vector.multi_reduction <add>, %37, %cst_13 [0] : vector<10x128xf32> to vector<128xf32>
    %42 = vector.shape_cast %41 : vector<128xf32> to vector<1x128xf32>
    %cst_14 = arith.constant dense<0.000000e+00> : vector<128xf32>
    %43 = vector.multi_reduction <add>, %40, %cst_14 [0] : vector<10x128xf32> to vector<128xf32>
    %44 = vector.shape_cast %43 : vector<128xf32> to vector<1x128xf32>
    %45 = arith.addf %42, %44 : vector<1x128xf32>
    %46 = tpu.reciprocal %45 : vector<1x128xf32> -> vector<1x128xf32>
    %47 = arith.mulf %37, %2 : vector<10x128xf32>
    %cst_15 = arith.constant dense<0.000000e+00> : vector<128xf32>
    %48 = vector.multi_reduction <add>, %47, %cst_15 [0] : vector<10x128xf32> to vector<128xf32>
    %49 = vector.shape_cast %48 : vector<128xf32> to vector<1x128xf32>
    %50 = arith.mulf %40, %8 : vector<10x128xf32>
    %cst_16 = arith.constant dense<0.000000e+00> : vector<128xf32>
    %51 = vector.multi_reduction <add>, %50, %cst_16 [0] : vector<10x128xf32> to vector<128xf32>
    %52 = vector.shape_cast %51 : vector<128xf32> to vector<1x128xf32>
    %53 = arith.addf %49, %52 : vector<1x128xf32>
    %54 = arith.mulf %37, %5 : vector<10x128xf32>
    %cst_17 = arith.constant dense<0.000000e+00> : vector<128xf32>
    %55 = vector.multi_reduction <add>, %54, %cst_17 [0] : vector<10x128xf32> to vector<128xf32>
    %56 = vector.shape_cast %55 : vector<128xf32> to vector<1x128xf32>
    %57 = arith.mulf %40, %11 : vector<10x128xf32>
    %cst_18 = arith.constant dense<0.000000e+00> : vector<128xf32>
    %58 = vector.multi_reduction <add>, %57, %cst_18 [0] : vector<10x128xf32> to vector<128xf32>
    %59 = vector.shape_cast %58 : vector<128xf32> to vector<1x128xf32>
    %60 = arith.addf %56, %59 : vector<1x128xf32>
    %61 = vector.broadcast %12 : f32 to vector<1x128xf32>
    %62 = arith.mulf %61, %53 : vector<1x128xf32>
    %63 = vector.broadcast %14 : f32 to vector<1x128xf32>
    %64 = arith.mulf %63, %60 : vector<1x128xf32>
    %65 = arith.addf %62, %64 : vector<1x128xf32>
    %66 = arith.mulf %65, %46 : vector<1x128xf32>
    %67 = vector.broadcast %16 : f32 to vector<1x128xf32>
    %68 = arith.addf %66, %67 : vector<1x128xf32>
    %69 = vector.broadcast %13 : f32 to vector<1x128xf32>
    %70 = arith.mulf %69, %53 : vector<1x128xf32>
    %71 = vector.broadcast %15 : f32 to vector<1x128xf32>
    %72 = arith.mulf %71, %60 : vector<1x128xf32>
    %73 = arith.addf %70, %72 : vector<1x128xf32>
    %74 = arith.mulf %73, %46 : vector<1x128xf32>
    %75 = vector.broadcast %17 : f32 to vector<1x128xf32>
    %76 = arith.addf %74, %75 : vector<1x128xf32>
    %c2 = arith.constant 2 : index
    %77 = memref.load %arg1[%c2] : memref<12xf32, #tpu.memory_space<smem>>
    %c3 = arith.constant 3 : index
    %78 = memref.load %arg1[%c3] : memref<12xf32, #tpu.memory_space<smem>>
    %79 = vector.broadcast %77 : f32 to vector<10x128xf32>
    %80 = arith.mulf %79, %2 : vector<10x128xf32>
    %81 = vector.broadcast %78 : f32 to vector<10x128xf32>
    %82 = arith.mulf %81, %5 : vector<10x128xf32>
    %83 = arith.addf %80, %82 : vector<10x128xf32>
    %84 = vector.broadcast %77 : f32 to vector<10x128xf32>
    %85 = arith.mulf %84, %8 : vector<10x128xf32>
    %86 = vector.broadcast %78 : f32 to vector<10x128xf32>
    %87 = arith.mulf %86, %11 : vector<10x128xf32>
    %88 = arith.addf %85, %87 : vector<10x128xf32>
    %cst_19 = arith.constant dense<0xFF800000> : vector<128xf32>
    %89 = vector.multi_reduction <maximumf>, %83, %cst_19 [0] : vector<10x128xf32> to vector<128xf32>
    %90 = vector.shape_cast %89 : vector<128xf32> to vector<1x128xf32>
    %cst_20 = arith.constant dense<0xFF800000> : vector<128xf32>
    %91 = vector.multi_reduction <maximumf>, %88, %cst_20 [0] : vector<10x128xf32> to vector<128xf32>
    %92 = vector.shape_cast %91 : vector<128xf32> to vector<1x128xf32>
    %93 = arith.maximumf %90, %92 : vector<1x128xf32>
    %94 = vector.broadcast %93 : vector<1x128xf32> to vector<10x128xf32>
    %95 = arith.subf %83, %94 : vector<10x128xf32>
    %96 = math.exp %95 : vector<10x128xf32>
    %97 = vector.broadcast %93 : vector<1x128xf32> to vector<10x128xf32>
    %98 = arith.subf %88, %97 : vector<10x128xf32>
    %99 = math.exp %98 : vector<10x128xf32>
    %cst_21 = arith.constant dense<0.000000e+00> : vector<128xf32>
    %100 = vector.multi_reduction <add>, %96, %cst_21 [0] : vector<10x128xf32> to vector<128xf32>
    %101 = vector.shape_cast %100 : vector<128xf32> to vector<1x128xf32>
    %cst_22 = arith.constant dense<0.000000e+00> : vector<128xf32>
    %102 = vector.multi_reduction <add>, %99, %cst_22 [0] : vector<10x128xf32> to vector<128xf32>
    %103 = vector.shape_cast %102 : vector<128xf32> to vector<1x128xf32>
    %104 = arith.addf %101, %103 : vector<1x128xf32>
    %105 = tpu.reciprocal %104 : vector<1x128xf32> -> vector<1x128xf32>
    %106 = arith.mulf %96, %2 : vector<10x128xf32>
    %cst_23 = arith.constant dense<0.000000e+00> : vector<128xf32>
    %107 = vector.multi_reduction <add>, %106, %cst_23 [0] : vector<10x128xf32> to vector<128xf32>
    %108 = vector.shape_cast %107 : vector<128xf32> to vector<1x128xf32>
    %109 = arith.mulf %99, %8 : vector<10x128xf32>
    %cst_24 = arith.constant dense<0.000000e+00> : vector<128xf32>
    %110 = vector.multi_reduction <add>, %109, %cst_24 [0] : vector<10x128xf32> to vector<128xf32>
    %111 = vector.shape_cast %110 : vector<128xf32> to vector<1x128xf32>
    %112 = arith.addf %108, %111 : vector<1x128xf32>
    %113 = arith.mulf %96, %5 : vector<10x128xf32>
    %cst_25 = arith.constant dense<0.000000e+00> : vector<128xf32>
    %114 = vector.multi_reduction <add>, %113, %cst_25 [0] : vector<10x128xf32> to vector<128xf32>
    %115 = vector.shape_cast %114 : vector<128xf32> to vector<1x128xf32>
    %116 = arith.mulf %99, %11 : vector<10x128xf32>
    %cst_26 = arith.constant dense<0.000000e+00> : vector<128xf32>
    %117 = vector.multi_reduction <add>, %116, %cst_26 [0] : vector<10x128xf32> to vector<128xf32>
    %118 = vector.shape_cast %117 : vector<128xf32> to vector<1x128xf32>
    %119 = arith.addf %115, %118 : vector<1x128xf32>
    %120 = vector.broadcast %12 : f32 to vector<1x128xf32>
    %121 = arith.mulf %120, %112 : vector<1x128xf32>
    %122 = vector.broadcast %14 : f32 to vector<1x128xf32>
    %123 = arith.mulf %122, %119 : vector<1x128xf32>
    %124 = arith.addf %121, %123 : vector<1x128xf32>
    %125 = arith.mulf %124, %105 : vector<1x128xf32>
    %126 = vector.broadcast %16 : f32 to vector<1x128xf32>
    %127 = arith.addf %125, %126 : vector<1x128xf32>
    %128 = vector.broadcast %13 : f32 to vector<1x128xf32>
    %129 = arith.mulf %128, %112 : vector<1x128xf32>
    %130 = vector.broadcast %15 : f32 to vector<1x128xf32>
    %131 = arith.mulf %130, %119 : vector<1x128xf32>
    %132 = arith.addf %129, %131 : vector<1x128xf32>
    %133 = arith.mulf %132, %105 : vector<1x128xf32>
    %134 = vector.broadcast %17 : f32 to vector<1x128xf32>
    %135 = arith.addf %133, %134 : vector<1x128xf32>
    %c4 = arith.constant 4 : index
    %136 = memref.load %arg1[%c4] : memref<12xf32, #tpu.memory_space<smem>>
    %c5 = arith.constant 5 : index
    %137 = memref.load %arg1[%c5] : memref<12xf32, #tpu.memory_space<smem>>
    %138 = vector.broadcast %136 : f32 to vector<10x128xf32>
    %139 = arith.mulf %138, %2 : vector<10x128xf32>
    %140 = vector.broadcast %137 : f32 to vector<10x128xf32>
    %141 = arith.mulf %140, %5 : vector<10x128xf32>
    %142 = arith.addf %139, %141 : vector<10x128xf32>
    %143 = vector.broadcast %136 : f32 to vector<10x128xf32>
    %144 = arith.mulf %143, %8 : vector<10x128xf32>
    %145 = vector.broadcast %137 : f32 to vector<10x128xf32>
    %146 = arith.mulf %145, %11 : vector<10x128xf32>
    %147 = arith.addf %144, %146 : vector<10x128xf32>
    %cst_27 = arith.constant dense<0xFF800000> : vector<128xf32>
    %148 = vector.multi_reduction <maximumf>, %142, %cst_27 [0] : vector<10x128xf32> to vector<128xf32>
    %149 = vector.shape_cast %148 : vector<128xf32> to vector<1x128xf32>
    %cst_28 = arith.constant dense<0xFF800000> : vector<128xf32>
    %150 = vector.multi_reduction <maximumf>, %147, %cst_28 [0] : vector<10x128xf32> to vector<128xf32>
    %151 = vector.shape_cast %150 : vector<128xf32> to vector<1x128xf32>
    %152 = arith.maximumf %149, %151 : vector<1x128xf32>
    %153 = vector.broadcast %152 : vector<1x128xf32> to vector<10x128xf32>
    %154 = arith.subf %142, %153 : vector<10x128xf32>
    %155 = math.exp %154 : vector<10x128xf32>
    %156 = vector.broadcast %152 : vector<1x128xf32> to vector<10x128xf32>
    %157 = arith.subf %147, %156 : vector<10x128xf32>
    %158 = math.exp %157 : vector<10x128xf32>
    %cst_29 = arith.constant dense<0.000000e+00> : vector<128xf32>
    %159 = vector.multi_reduction <add>, %155, %cst_29 [0] : vector<10x128xf32> to vector<128xf32>
    %160 = vector.shape_cast %159 : vector<128xf32> to vector<1x128xf32>
    %cst_30 = arith.constant dense<0.000000e+00> : vector<128xf32>
    %161 = vector.multi_reduction <add>, %158, %cst_30 [0] : vector<10x128xf32> to vector<128xf32>
    %162 = vector.shape_cast %161 : vector<128xf32> to vector<1x128xf32>
    %163 = arith.addf %160, %162 : vector<1x128xf32>
    %164 = tpu.reciprocal %163 : vector<1x128xf32> -> vector<1x128xf32>
    %165 = arith.mulf %155, %2 : vector<10x128xf32>
    %cst_31 = arith.constant dense<0.000000e+00> : vector<128xf32>
    %166 = vector.multi_reduction <add>, %165, %cst_31 [0] : vector<10x128xf32> to vector<128xf32>
    %167 = vector.shape_cast %166 : vector<128xf32> to vector<1x128xf32>
    %168 = arith.mulf %158, %8 : vector<10x128xf32>
    %cst_32 = arith.constant dense<0.000000e+00> : vector<128xf32>
    %169 = vector.multi_reduction <add>, %168, %cst_32 [0] : vector<10x128xf32> to vector<128xf32>
    %170 = vector.shape_cast %169 : vector<128xf32> to vector<1x128xf32>
    %171 = arith.addf %167, %170 : vector<1x128xf32>
    %172 = arith.mulf %155, %5 : vector<10x128xf32>
    %cst_33 = arith.constant dense<0.000000e+00> : vector<128xf32>
    %173 = vector.multi_reduction <add>, %172, %cst_33 [0] : vector<10x128xf32> to vector<128xf32>
    %174 = vector.shape_cast %173 : vector<128xf32> to vector<1x128xf32>
    %175 = arith.mulf %158, %11 : vector<10x128xf32>
    %cst_34 = arith.constant dense<0.000000e+00> : vector<128xf32>
    %176 = vector.multi_reduction <add>, %175, %cst_34 [0] : vector<10x128xf32> to vector<128xf32>
    %177 = vector.shape_cast %176 : vector<128xf32> to vector<1x128xf32>
    %178 = arith.addf %174, %177 : vector<1x128xf32>
    %179 = vector.broadcast %12 : f32 to vector<1x128xf32>
    %180 = arith.mulf %179, %171 : vector<1x128xf32>
    %181 = vector.broadcast %14 : f32 to vector<1x128xf32>
    %182 = arith.mulf %181, %178 : vector<1x128xf32>
    %183 = arith.addf %180, %182 : vector<1x128xf32>
    %184 = arith.mulf %183, %164 : vector<1x128xf32>
    %185 = vector.broadcast %16 : f32 to vector<1x128xf32>
    %186 = arith.addf %184, %185 : vector<1x128xf32>
    %187 = vector.broadcast %13 : f32 to vector<1x128xf32>
    %188 = arith.mulf %187, %171 : vector<1x128xf32>
    %189 = vector.broadcast %15 : f32 to vector<1x128xf32>
    %190 = arith.mulf %189, %178 : vector<1x128xf32>
    %191 = arith.addf %188, %190 : vector<1x128xf32>
    %192 = arith.mulf %191, %164 : vector<1x128xf32>
    %193 = vector.broadcast %17 : f32 to vector<1x128xf32>
    %194 = arith.addf %192, %193 : vector<1x128xf32>
    %195 = tpu.concatenate %68, %76, %127, %135, %186, %194 in 0 : vector<1x128xf32>, vector<1x128xf32>, vector<1x128xf32>, vector<1x128xf32>, vector<1x128xf32>, vector<1x128xf32> -> vector<6x128xf32>
    %c0_35 = arith.constant 0 : index
    %c0_36 = arith.constant 0 : index
    %196 = vector.load %arg4[%c0_35, %c0_36] : memref<6x128xf32, #tpu.memory_space<vmem>>, vector<6x128xf32>
    tpu.vector_store %arg4[%c0_35, %c0_36], %195 {strides = array<i32>} : memref<6x128xf32, #tpu.memory_space<vmem>>, vector<6x128xf32>,
    return
  }
  func.func @transform_0(%arg0: i32) -> i32 {
    %c0_i32 = arith.constant 0 : i32
    %c0_i32_0 = arith.constant 0 : i32
    return %c0_i32 : i32
  }
  func.func @transform_1(%arg0: i32) -> (i32, i32, i32) {
    %c0_i32 = arith.constant 0 : i32
    %c0_i32_0 = arith.constant 0 : i32
    %c0_i32_1 = arith.constant 0 : i32
    return %c0_i32, %c0_i32_0, %arg0 : i32, i32, i32
  }
  func.func @transform_2(%arg0: i32) -> (i32, i32, i32) {
    %c0_i32 = arith.constant 0 : i32
    %c0_i32_0 = arith.constant 0 : i32
    %c0_i32_1 = arith.constant 0 : i32
    return %c0_i32, %c0_i32_0, %arg0 : i32, i32, i32
  }
  func.func @transform_3(%arg0: i32) -> (i32, i32) {
    %c0_i32 = arith.constant 0 : i32
    %c0_i32_0 = arith.constant 0 : i32
    return %c0_i32, %arg0 : i32, i32
  }
}

</mosaic_0001>

<llo_original>
// kernel: transformer_planner_forward.1
$region0: #{transformer_planner_forward.1}
  #allocation0 [shape = 'u32[]', space=smem, size = 0x4, offset = 0x4, fixed_abs, tag = 'smem constant byte address 0x4 - core index']
  #allocation1 [shape = 'u32[72,128]{1,0:T(1,128)}', space=vmem, size = 0x9000, scoped, tag = 'internal scratch']
  %s0 = inlined_call_operand.vmem [shape: f32[12], index: 0, kind: input, shape index: {}]
  %s1 = inlined_call_operand.vmem [shape: bf16[2,10,128], index: 1, kind: input, shape index: {}]
  %s2 = inlined_call_operand.vmem [shape: bf16[2,10,128], index: 2, kind: input, shape index: {}]
  %s3 = inlined_call_operand.vmem [shape: f32[6,128], index: 3, kind: output, shape index: {}]
  %s4 = sld [smem:[#allocation0]]
  $region26: #{transformer_planner_forward.1} parent=0
    _
  %s6 = ssub.s32 1, %s4
  %s7 = scalar_select 0, %s6, %s4
  $region1: #{transformer_planner_forward.1} parent=0
    #allocation2 [shape = 'u8[512]{0}', space=smem, size = 0x200, scoped, tag = 'input window, operand 0, single buffered']
    #allocation3 [shape = 's32[1]{0}', space=sflag, size = 0x4, scoped, tag = 'scoped memory for transformer_planner_forward.1']
    %8 = vsyncpa [#allocation3], 0
    // Predicated region
    $region2: #{transformer_planner_forward.1} parent=1 // pred_check
      _
    $region3: #{transformer_planner_forward.1} parent=1 // pred_check_branch
      %10 = sbr.rel (0) target = $region5
    $region4: #{transformer_planner_forward.1} parent=1 // pred_region
      %12 = vsyncadd [#allocation3], 0
      %s14 = sshll.u32 %s0, 4
      %s15 = int_to_ptr.vmem [resolvable:$true] %s14
      %17 = dma.vmem_to_smem %s15, 16, [#allocation2], [#allocation3]
    $region5: #{transformer_planner_forward.1} parent=1 // pred_fallthru
      _
    // Predicated region
    $region6: #{transformer_planner_forward.1} parent=1 // pred_check
      _
    $region7: #{transformer_planner_forward.1} parent=1 // pred_check_branch
      %19 = sbr.rel (0) target = $region9
    $region8: #{transformer_planner_forward.1} parent=1 // pred_region
      _
    $region9: #{transformer_planner_forward.1} parent=1 // pred_fallthru
      _
    // Predicated region
    $region10: #{transformer_planner_forward.1} parent=1 // pred_check
      _
    $region11: #{transformer_planner_forward.1} parent=1 // pred_check_branch
      %21 = sbr.rel (0) target = $region13
    $region12: #{transformer_planner_forward.1} parent=1 // pred_region
      _
    $region13: #{transformer_planner_forward.1} parent=1 // pred_fallthru
      _
    // Predicated region
    $region14: #{transformer_planner_forward.1} parent=1 // pred_check
      _
    $region15: #{transformer_planner_forward.1} parent=1 // pred_check_branch
      %23 = sbr.rel (0) target = $region17
    $region16: #{transformer_planner_forward.1} parent=1 // pred_region
      %25 = dma.done [#allocation3], 16
    $region17: #{transformer_planner_forward.1} parent=1 // pred_fallthru
      _
    %26 = sfence
    %v27 = vld [vmem:[%s1] sm:$0xf]
    %v28 = vld [vmem:[%s1 + $0x4] sm:$0x1]
    %v29 = vunpack.c.l.bf16 %v27
    %v30 = vunpack.c.l.bf16 %v28
    %s31 = scalar_lea.vmem %s1, 8
    %v32 = vld [vmem:[%s31] sm:$0xf]
    %v33 = vld [vmem:[%s31 + $0x4] sm:$0x1]
    %v34 = vunpack.c.l.bf16 %v32
    %v35 = vunpack.c.l.bf16 %v33
    %v36 = vld [vmem:[%s2] sm:$0xf]
    %v37 = vld [vmem:[%s2 + $0x4] sm:$0x1]
    %v38 = vunpack.c.l.bf16 %v36
    %v39 = vunpack.c.l.bf16 %v37
    %s40 = scalar_lea.vmem %s2, 8
    %v41 = vld [vmem:[%s40] sm:$0xf]
    %v42 = vld [vmem:[%s40 + $0x4] sm:$0x1]
    %v43 = vunpack.c.l.bf16 %v41
    %v44 = vunpack.c.l.bf16 %v42
    %s45 = sld [smem:[#allocation2 + $0x6]]
    %s46 = sld [smem:[#allocation2 + $0x7]]
    %s47 = sld [smem:[#allocation2 + $0x8]]
    %s48 = sld [smem:[#allocation2 + $0x9]]
    %s49 = sld [smem:[#allocation2 + $0xa]]
    %s50 = sld [smem:[#allocation2 + $0xb]]
    %s51 = sld [smem:[#allocation2]]
    %s52 = sld [smem:[#allocation2 + $0x1]]
    %v53 = vstv %s51
    %v54 = vmul.f32 %v53, %v29
    %v55 = vmul.f32 %v53, %v30
    %v56 = vstv %s52
    %v57 = vmul.f32 %v56, %v34
    %v58 = vmul.f32 %v56, %v35
    %v59 = vadd.f32 %v54, %v57
    %v60 = vadd.f32 %v55, %v58
    %v61 = vmul.f32 %v53, %v38
    %v62 = vmul.f32 %v53, %v39
    %v63 = vmul.f32 %v56, %v43
    %v64 = vmul.f32 %v56, %v44
    %v65 = vadd.f32 %v61, %v63
    %v66 = vadd.f32 %v62, %v64
    %vm67 = vcmask 1041408
    %v68 = vsel %vm67, %v60, -inf
    %v69 = vmax.f32 %v59, %v68
    %v70 = vrot.slane %v69, 4
    %v71 = vmax.f32 %v69, %v70
    %v72 = vrot.slane %v71, 2
    %v73 = vmax.f32 %v71, %v72
    %v74 = vrot.slane %v73, 1
    %v75 = vmax.f32 %v73, %v74
    %v76 = vsel %vm67, %v66, -inf
    %v77 = vmax.f32 %v65, %v76
    %v78 = vrot.slane %v77, 4
    %v79 = vmax.f32 %v77, %v78
    %v80 = vrot.slane %v79, 2
    %v81 = vmax.f32 %v79, %v80
    %v82 = vrot.slane %v81, 1
    %v83 = vmax.f32 %v81, %v82
    %v84 = vmax.f32 %v75, %v83
    %v85 = vsub.f32 %v59, %v84
    %v86 = vsub.f32 %v60, %v84
    %v87 = vmul.f32 %v85, 1.442695
    %v88 = vpow.pop %v87
    %v89 = vmul.f32 %v86, 1.442695
    %v90 = vpow.pop %v89
    %v91 = vsub.f32 %v65, %v84
    %v92 = vsub.f32 %v66, %v84
    %v93 = vmul.f32 %v91, 1.442695
    %v94 = vpow.pop %v93
    %v95 = vmul.f32 %v92, 1.442695
    %v96 = vpow.pop %v95
    %v97 = vsel %vm67, %v90, 0.0
    %v98 = vadd.f32 %v88, %v97
    %v99 = vrot.slane %v98, 4
    %v100 = vadd.f32 %v98, %v99
    %v101 = vrot.slane %v100, 2
    %v102 = vadd.f32 %v100, %v101
    %v103 = vrot.slane %v102, 1
    %v104 = vadd.f32 %v102, %v103
    %v105 = vsel %vm67, %v96, 0.0
    %v106 = vadd.f32 %v94, %v105
    %v107 = vrot.slane %v106, 4
    %v108 = vadd.f32 %v106, %v107
    %v109 = vrot.slane %v108, 2
    %v110 = vadd.f32 %v108, %v109
    %v111 = vrot.slane %v110, 1
    %v112 = vadd.f32 %v110, %v111
    %v113 = vadd.f32 %v104, %v112
    %v114 = vrcp.pop %v113
    %v115 = vmul.f32 %v113, %v114
    %v116 = vsub.f32 1.0, %v115
    %v117 = vmul.f32 %v114, %v116
    %v118 = vadd.f32 %v114, %v117
    %vm119 = vweird.f32 %v113
    %vm120 = vweird.f32 %v114
    %vm121 = vmor %vm119, %vm120
    %v122 = vsel %vm121, %v114, %v118
    %v123 = vand.u32 2147483647, %v113
    %vm124 = vcmp.eq.f32.partialorder %v123, 8.507059e+37
    %v125 = vand.u32 %v113, 2147483648
    %v126 = vor.u32 1.1754944e-38, %v125
    %v127 = vsel %vm124, %v126, %v122
    %v128 = vmul.f32 %v88, %v29
    %v129 = vmul.f32 %v90, %v30
    %v130 = vsel %vm67, %v129, 0.0
    %v131 = vadd.f32 %v128, %v130
    %v132 = vrot.slane %v131, 4
    %v133 = vadd.f32 %v131, %v132
    %v134 = vrot.slane %v133, 2
    %v135 = vadd.f32 %v133, %v134
    %v136 = vrot.slane %v135, 1
    %v137 = vadd.f32 %v135, %v136
    %v138 = vmul.f32 %v94, %v38
    %v139 = vmul.f32 %v96, %v39
    %v140 = vsel %vm67, %v139, 0.0
    %v141 = vadd.f32 %v138, %v140
    %v142 = vrot.slane %v141, 4
    %v143 = vadd.f32 %v141, %v142
    %v144 = vrot.slane %v143, 2
    %v145 = vadd.f32 %v143, %v144
    %v146 = vrot.slane %v145, 1
    %v147 = vadd.f32 %v145, %v146
    %v148 = vadd.f32 %v137, %v147
    %v149 = vmul.f32 %v88, %v34
    %v150 = vmul.f32 %v90, %v35
    %v151 = vsel %vm67, %v150, 0.0
    %v152 = vadd.f32 %v149, %v151
    %v153 = vrot.slane %v152, 4
    %v154 = vadd.f32 %v152, %v153
    %v155 = vrot.slane %v154, 2
    %v156 = vadd.f32 %v154, %v155
    %v157 = vrot.slane %v156, 1
    %v158 = vadd.f32 %v156, %v157
    %v159 = vmul.f32 %v94, %v43
    %v160 = vmul.f32 %v96, %v44
    %v161 = vsel %vm67, %v160, 0.0
    %v162 = vadd.f32 %v159, %v161
    %v163 = vrot.slane %v162, 4
    %v164 = vadd.f32 %v162, %v163
    %v165 = vrot.slane %v164, 2
    %v166 = vadd.f32 %v164, %v165
    %v167 = vrot.slane %v166, 1
    %v168 = vadd.f32 %v166, %v167
    %v169 = vadd.f32 %v158, %v168
    %v170 = vstv %s45
    %v171 = vmul.f32 %v170, %v148
    %v172 = vstv %s47
    %v173 = vmul.f32 %v172, %v169
    %v174 = vadd.f32 %v171, %v173
    %v175 = vmul.f32 %v174, %v127
    %v176 = vstv %s49
    %v177 = vadd.f32 %v175, %v176
    %v178 = vstv %s46
    %v179 = vmul.f32 %v178, %v148
    %v180 = vstv %s48
    %v181 = vmul.f32 %v180, %v169
    %v182 = vadd.f32 %v179, %v181
    %v183 = vmul.f32 %v182, %v127
    %v184 = vstv %s50
    %v185 = vadd.f32 %v183, %v184
    %s186 = sld [smem:[#allocation2 + $0x2]]
    %s187 = sld [smem:[#allocation2 + $0x3]]
    %v188 = vstv %s186
    %v189 = vmul.f32 %v188, %v29
    %v190 = vmul.f32 %v188, %v30
    %v191 = vstv %s187
    %v192 = vmul.f32 %v191, %v34
    %v193 = vmul.f32 %v191, %v35
    %v194 = vadd.f32 %v189, %v192
    %v195 = vadd.f32 %v190, %v193
    %v196 = vmul.f32 %v188, %v38
    %v197 = vmul.f32 %v188, %v39
    %v198 = vmul.f32 %v191, %v43
    %v199 = vmul.f32 %v191, %v44
    %v200 = vadd.f32 %v196, %v198
    %v201 = vadd.f32 %v197, %v199
    %v202 = vsel %vm67, %v195, -inf
    %v203 = vmax.f32 %v194, %v202
    %v204 = vrot.slane %v203, 4
    %v205 = vmax.f32 %v203, %v204
    %v206 = vrot.slane %v205, 2
    %v207 = vmax.f32 %v205, %v206
    %v208 = vrot.slane %v207, 1
    %v209 = vmax.f32 %v207, %v208
    %v210 = vsel %vm67, %v201, -inf
    %v211 = vmax.f32 %v200, %v210
    %v212 = vrot.slane %v211, 4
    %v213 = vmax.f32 %v211, %v212
    %v214 = vrot.slane %v213, 2
    %v215 = vmax.f32 %v213, %v214
    %v216 = vrot.slane %v215, 1
    %v217 = vmax.f32 %v215, %v216
    %v218 = vmax.f32 %v209, %v217
    %v219 = vsub.f32 %v194, %v218
    %v220 = vsub.f32 %v195, %v218
    %v221 = vmul.f32 %v219, 1.442695
    %v222 = vpow.pop %v221
    %v223 = vmul.f32 %v220, 1.442695
    %v224 = vpow.pop %v223
    %v225 = vsub.f32 %v200, %v218
    %v226 = vsub.f32 %v201, %v218
    %v227 = vmul.f32 %v225, 1.442695
    %v228 = vpow.pop %v227
    %v229 = vmul.f32 %v226, 1.442695
    %v230 = vpow.pop %v229
    %v231 = vsel %vm67, %v224, 0.0
    %v232 = vadd.f32 %v222, %v231
    %v233 = vrot.slane %v232, 4
    %v234 = vadd.f32 %v232, %v233
    %v235 = vrot.slane %v234, 2
    %v236 = vadd.f32 %v234, %v235
    %v237 = vrot.slane %v236, 1
    %v238 = vadd.f32 %v236, %v237
    %v239 = vsel %vm67, %v230, 0.0
    %v240 = vadd.f32 %v228, %v239
    %v241 = vrot.slane %v240, 4
    %v242 = vadd.f32 %v240, %v241
    %v243 = vrot.slane %v242, 2
    %v244 = vadd.f32 %v242, %v243
    %v245 = vrot.slane %v244, 1
    %v246 = vadd.f32 %v244, %v245
    %v247 = vadd.f32 %v238, %v246
    %v248 = vrcp.pop %v247
    %v249 = vmul.f32 %v247, %v248
    %v250 = vsub.f32 1.0, %v249
    %v251 = vmul.f32 %v248, %v250
    %v252 = vadd.f32 %v248, %v251
    %vm253 = vweird.f32 %v247
    %vm254 = vweird.f32 %v248
    %vm255 = vmor %vm253, %vm254
    %v256 = vsel %vm255, %v248, %v252
    %v257 = vand.u32 2147483647, %v247
    %vm258 = vcmp.eq.f32.partialorder %v257, 8.507059e+37
    %v259 = vand.u32 %v247, 2147483648
    %v260 = vor.u32 1.1754944e-38, %v259
    %v261 = vsel %vm258, %v260, %v256
    %v262 = vmul.f32 %v222, %v29
    %v263 = vmul.f32 %v224, %v30
    %v264 = vsel %vm67, %v263, 0.0
    %v265 = vadd.f32 %v262, %v264
    %v266 = vrot.slane %v265, 4
    %v267 = vadd.f32 %v265, %v266
    %v268 = vrot.slane %v267, 2
    %v269 = vadd.f32 %v267, %v268
    %v270 = vrot.slane %v269, 1
    %v271 = vadd.f32 %v269, %v270
    %v272 = vmul.f32 %v228, %v38
    %v273 = vmul.f32 %v230, %v39
    %v274 = vsel %vm67, %v273, 0.0
    %v275 = vadd.f32 %v272, %v274
    %v276 = vrot.slane %v275, 4
    %v277 = vadd.f32 %v275, %v276
    %v278 = vrot.slane %v277, 2
    %v279 = vadd.f32 %v277, %v278
    %v280 = vrot.slane %v279, 1
    %v281 = vadd.f32 %v279, %v280
    %v282 = vadd.f32 %v271, %v281
    %v283 = vmul.f32 %v222, %v34
    %v284 = vmul.f32 %v224, %v35
    %v285 = vsel %vm67, %v284, 0.0
    %v286 = vadd.f32 %v283, %v285
    %v287 = vrot.slane %v286, 4
    %v288 = vadd.f32 %v286, %v287
    %v289 = vrot.slane %v288, 2
    %v290 = vadd.f32 %v288, %v289
    %v291 = vrot.slane %v290, 1
    %v292 = vadd.f32 %v290, %v291
    %v293 = vmul.f32 %v228, %v43
    %v294 = vmul.f32 %v230, %v44
    %v295 = vsel %vm67, %v294, 0.0
    %v296 = vadd.f32 %v293, %v295
    %v297 = vrot.slane %v296, 4
    %v298 = vadd.f32 %v296, %v297
    %v299 = vrot.slane %v298, 2
    %v300 = vadd.f32 %v298, %v299
    %v301 = vrot.slane %v300, 1
    %v302 = vadd.f32 %v300, %v301
    %v303 = vadd.f32 %v292, %v302
    %v304 = vmul.f32 %v170, %v282
    %v305 = vmul.f32 %v172, %v303
    %v306 = vadd.f32 %v304, %v305
    %v307 = vmul.f32 %v306, %v261
    %v308 = vadd.f32 %v307, %v176
    %v309 = vmul.f32 %v178, %v282
    %v310 = vmul.f32 %v180, %v303
    %v311 = vadd.f32 %v309, %v310
    %v312 = vmul.f32 %v311, %v261
    %v313 = vadd.f32 %v312, %v184
    %s314 = sld [smem:[#allocation2 + $0x4]]
    %s315 = sld [smem:[#allocation2 + $0x5]]
    %v316 = vstv %s314
    %v317 = vmul.f32 %v316, %v29
    %v318 = vmul.f32 %v316, %v30
    %v319 = vstv %s315
    %v320 = vmul.f32 %v319, %v34
    %v321 = vmul.f32 %v319, %v35
    %v322 = vadd.f32 %v317, %v320
    %v323 = vadd.f32 %v318, %v321
    %v324 = vmul.f32 %v316, %v38
    %v325 = vmul.f32 %v316, %v39
    %v326 = vmul.f32 %v319, %v43
    %v327 = vmul.f32 %v319, %v44
    %v328 = vadd.f32 %v324, %v326
    %v329 = vadd.f32 %v325, %v327
    %v330 = vsel %vm67, %v323, -inf
    %v331 = vmax.f32 %v322, %v330
    %v332 = vrot.slane %v331, 4
    %v333 = vmax.f32 %v331, %v332
    %v334 = vrot.slane %v333, 2
    %v335 = vmax.f32 %v333, %v334
    %v336 = vrot.slane %v335, 1
    %v337 = vmax.f32 %v335, %v336
    %v338 = vsel %vm67, %v329, -inf
    %v339 = vmax.f32 %v328, %v338
    %v340 = vrot.slane %v339, 4
    %v341 = vmax.f32 %v339, %v340
    %v342 = vrot.slane %v341, 2
    %v343 = vmax.f32 %v341, %v342
    %v344 = vrot.slane %v343, 1
    %v345 = vmax.f32 %v343, %v344
    %v346 = vmax.f32 %v337, %v345
    %v347 = vsub.f32 %v322, %v346
    %v348 = vsub.f32 %v323, %v346
    %v349 = vmul.f32 %v347, 1.442695
    %v350 = vpow.pop %v349
    %v351 = vmul.f32 %v348, 1.442695
    %v352 = vpow.pop %v351
    %v353 = vsub.f32 %v328, %v346
    %v354 = vsub.f32 %v329, %v346
    %v355 = vmul.f32 %v353, 1.442695
    %v356 = vpow.pop %v355
    %v357 = vmul.f32 %v354, 1.442695
    %v358 = vpow.pop %v357
    %v359 = vsel %vm67, %v352, 0.0
    %v360 = vadd.f32 %v350, %v359
    %v361 = vrot.slane %v360, 4
    %v362 = vadd.f32 %v360, %v361
    %v363 = vrot.slane %v362, 2
    %v364 = vadd.f32 %v362, %v363
    %v365 = vrot.slane %v364, 1
    %v366 = vadd.f32 %v364, %v365
    %v367 = vsel %vm67, %v358, 0.0
    %v368 = vadd.f32 %v356, %v367
    %v369 = vrot.slane %v368, 4
    %v370 = vadd.f32 %v368, %v369
    %v371 = vrot.slane %v370, 2
    %v372 = vadd.f32 %v370, %v371
    %v373 = vrot.slane %v372, 1
    %v374 = vadd.f32 %v372, %v373
    %v375 = vadd.f32 %v366, %v374
    %v376 = vrcp.pop %v375
    %v377 = vmul.f32 %v375, %v376
    %v378 = vsub.f32 1.0, %v377
    %v379 = vmul.f32 %v376, %v378
    %v380 = vadd.f32 %v376, %v379
    %vm381 = vweird.f32 %v375
    %vm382 = vweird.f32 %v376
    %vm383 = vmor %vm381, %vm382
    %v384 = vsel %vm383, %v376, %v380
    %v385 = vand.u32 2147483647, %v375
    %vm386 = vcmp.eq.f32.partialorder %v385, 8.507059e+37
    %v387 = vand.u32 %v375, 2147483648
    %v388 = vor.u32 1.1754944e-38, %v387
    %v389 = vsel %vm386, %v388, %v384
    %v390 = vmul.f32 %v350, %v29
    %v391 = vmul.f32 %v352, %v30
    %v392 = vsel %vm67, %v391, 0.0
    %v393 = vadd.f32 %v390, %v392
    %v394 = vrot.slane %v393, 4
    %v395 = vadd.f32 %v393, %v394
    %v396 = vrot.slane %v395, 2
    %v397 = vadd.f32 %v395, %v396
    %v398 = vrot.slane %v397, 1
    %v399 = vadd.f32 %v397, %v398
    %v400 = vmul.f32 %v356, %v38
    %v401 = vmul.f32 %v358, %v39
    %v402 = vsel %vm67, %v401, 0.0
    %v403 = vadd.f32 %v400, %v402
    %v404 = vrot.slane %v403, 4
    %v405 = vadd.f32 %v403, %v404
    %v406 = vrot.slane %v405, 2
    %v407 = vadd.f32 %v405, %v406
    %v408 = vrot.slane %v407, 1
    %v409 = vadd.f32 %v407, %v408
    %v410 = vadd.f32 %v399, %v409
    %v411 = vmul.f32 %v350, %v34
    %v412 = vmul.f32 %v352, %v35
    %v413 = vsel %vm67, %v412, 0.0
    %v414 = vadd.f32 %v411, %v413
    %v415 = vrot.slane %v414, 4
    %v416 = vadd.f32 %v414, %v415
    %v417 = vrot.slane %v416, 2
    %v418 = vadd.f32 %v416, %v417
    %v419 = vrot.slane %v418, 1
    %v420 = vadd.f32 %v418, %v419
    %v421 = vmul.f32 %v356, %v43
    %v422 = vmul.f32 %v358, %v44
    %v423 = vsel %vm67, %v422, 0.0
    %v424 = vadd.f32 %v421, %v423
    %v425 = vrot.slane %v424, 4
    %v426 = vadd.f32 %v424, %v425
    %v427 = vrot.slane %v426, 2
    %v428 = vadd.f32 %v426, %v427
    %v429 = vrot.slane %v428, 1
    %v430 = vadd.f32 %v428, %v429
    %v431 = vadd.f32 %v420, %v430
    %v432 = vmul.f32 %v170, %v410
    %v433 = vmul.f32 %v172, %v431
    %v434 = vadd.f32 %v432, %v433
    %v435 = vmul.f32 %v434, %v389
    %v436 = vadd.f32 %v435, %v176
    %v437 = vmul.f32 %v178, %v410
    %v438 = vmul.f32 %v180, %v431
    %v439 = vadd.f32 %v437, %v438
    %v440 = vmul.f32 %v439, %v389
    %v441 = vadd.f32 %v440, %v184
    %vm442 = vcmask 1040384
    %v443 = vsel %vm442, %v177, %v185
    %v444 = vsel %vm67, %v443, %v308
    %vm445 = vcmask 1042432
    %v446 = vsel %vm445, %v444, %v313
    %vm447 = vcmask 1043456
    %v448 = vsel %vm447, %v446, %v436
    %vm449 = vcmask 1044480
    %v450 = vsel %vm449, %v448, %v441
    %451 = vst [vmem:[%s3] sm:$0x3f] %v450
    // Predicated region
    $region18: #{transformer_planner_forward.1} parent=1 // pred_check
      _
    $region19: #{transformer_planner_forward.1} parent=1 // pred_check_branch
      %453 = sbr.rel (0) target = $region21
    $region20: #{transformer_planner_forward.1} parent=1 // pred_region
      _
    $region21: #{transformer_planner_forward.1} parent=1 // pred_fallthru
      _
    // Predicated region
    $region22: #{transformer_planner_forward.1} parent=1 // pred_check
      _
    $region23: #{transformer_planner_forward.1} parent=1 // pred_check_branch
      %455 = sbr.rel (0) target = $region25
    $region24: #{transformer_planner_forward.1} parent=1 // pred_region
      _
    $region25: #{transformer_planner_forward.1} parent=1 // pred_fallthru
      _
    %456 = vsyncpa [#allocation3], 1

</llo_original>
